<compile_context>
chip_gen: v5e
topology: v5e:2x2
jax: 0.10.0
libtpu: 0.0.40
codegen_flags: <defaults>
</compile_context>

<pallas_src>
import jax
import jax.numpy as jnp
from jax import lax
from jax.experimental import pallas as pl
from jax.experimental.pallas import tpu as pltpu


def mine_critic_kernel(x_ref, w1_ref, w2_ref, bw_ref, b3_ref, o_ref):
    # x tile arrives in natural (tm, in_dim) f32 layout; cast on-chip (VPU).
    x = x_ref[...].astype(w1_ref.dtype)

    # Packed per-feature columns: [b1 | b2 | w3 | 0]  -> (hidden, 1) slices.
    bw = bw_ref[...]                      # (hidden, 4) f32
    b1 = bw[:, 0:1]
    b2 = bw[:, 1:2]
    w3 = bw[:, 2:3]

    # Layer 1: contract in_dim of both operands -> (hidden, tm), f32 acc.
    # (Equivalent to W1 @ x^T; Mosaic handles the small in-tile transpose.)
    h1 = lax.dot_general(w1_ref[...], x,
                         dimension_numbers=(((1,), (1,)), ((), ())),
                         preferred_element_type=jnp.float32)
    h1 = jnp.maximum(h1 + b1, 0.0)        # f32 epilogue (VPU)

    # Layer 2: (hidden, hidden) @ (hidden, tm) -> (hidden, tm), f32 acc.
    h2 = jnp.dot(w2_ref[...], h1.astype(w2_ref.dtype),
                 preferred_element_type=jnp.float32)
    h2 = jnp.maximum(h2 + b2, 0.0)        # f32 epilogue (VPU)

    # Head: VPU multiply + XLU sublane reduce -> lane-dense (1, tm) row.
    out = jnp.sum(h2 * w3, axis=0, keepdims=True) + b3_ref[0]
    o_ref[...] = out.astype(o_ref.dtype)


def _round_up(a: int, m: int) -> int:
    return ((a + m - 1) // m) * m


def _pick_tm(B: int, tm_max: int = 512) -> int:
    """Batch tile (lane axis): multiple of 128, <= tm_max, and >= 2 grid
    steps whenever the batch allows (keeps both v7x TensorCores busy)."""
    Br = _round_up(B, 128)
    tm = min(tm_max, Br)
    if Br // tm < 2 and Br >= 256:
        tm = max(128, ((Br // 2) // 128) * 128)
    return tm


def _vmem_limit_bytes(tm: int, in_dim: int, hidden: int) -> int:
    lane = lambda n: _round_up(n, 128)
    sub = lambda n: _round_up(n, 8)
    per_step = (
        sub(tm) * lane(in_dim) * 4        # x tile (f32)
        + sub(hidden) * lane(in_dim) * 2  # W1 (bf16)
        + sub(hidden) * lane(hidden) * 2  # W2 (bf16)
        + sub(hidden) * lane(4) * 4       # packed [b1|b2|w3|0] (f32)
        + sub(1) * lane(tm) * 4           # output row (f32)
    )
    # double-buffered blocks + generous headroom for compiler scratch
    return max(4 << 20, min(128 << 20, 4 * per_step))


def mine_critic_forward(x, params, *, tm_max=512, compute_dtype=jnp.bfloat16):
    """Run the MineCritic MLP.

    x: (B, in_dim) f32.  params: PyTorch-layout (W (out,in), b (out,)) tuples.
    Returns (B, 1) f32.
    """
    w1, b1, w2, b2, w3, b3 = params
    B, in_dim = x.shape
    hidden = w1.shape[0]

    tm = _pick_tm(B, tm_max)
    Bp = _round_up(B, tm)
    grid = (Bp // tm,)

    # x keeps its natural layout; pad only if the batch is ragged.
    if Bp != B:
        x = jnp.pad(x, ((0, Bp - B), (0, 0)))

    # Parameter-side plumbing (tiny, one-time per call; cached in practice).
    w1c = w1.astype(compute_dtype)                       # (hidden, in_dim)
    w2c = w2.astype(compute_dtype)                       # (hidden, hidden)
    packed = jnp.concatenate(                            # (hidden, 4) f32
        [b1.reshape(hidden, 1), b2.reshape(hidden, 1),
         w3.reshape(hidden, 1),
         jnp.zeros((hidden, 1), jnp.float32)], axis=1).astype(jnp.float32)
    b3c = b3.reshape(1).astype(jnp.float32)              # scalar -> SMEM

    full = lambda i: (0, 0)                              # resident blocks

    flops = 2 * B * (in_dim * hidden + hidden * hidden + hidden)
    bytes_accessed = (Bp * in_dim * 4 + hidden * in_dim * 2
                      + hidden * hidden * 2 + hidden * 4 * 4 + 4 + Bp * 4)

    out = pl.pallas_call(
        mine_critic_kernel,
        out_shape=jax.ShapeDtypeStruct((1, Bp), jnp.float32),
        grid_spec=pltpu.PrefetchScalarGridSpec(
            num_scalar_prefetch=0,
            grid=grid,
            in_specs=[
                pl.BlockSpec((tm, in_dim), lambda i: (i, 0)),        # x tile
                pl.BlockSpec((hidden, in_dim), full),                # W1
                pl.BlockSpec((hidden, hidden), full),                # W2
                pl.BlockSpec((hidden, 4), full),                     # [b1|b2|w3|0]
                pl.BlockSpec(memory_space=pltpu.MemorySpace.SMEM),   # b3 scalar
            ],
            out_specs=pl.BlockSpec((1, tm), lambda i: (0, i)),       # lane-dense
        ),
        compiler_params=pltpu.CompilerParams(
            dimension_semantics=("parallel",),
            vmem_limit_bytes=_vmem_limit_bytes(tm, in_dim, hidden)),
        cost_estimate=pl.CostEstimate(
            flops=flops, transcendentals=0, bytes_accessed=bytes_accessed),
    )(x, w1c, w2c, packed, b3c)

    # (1, Bp) lane-dense slab -> (B, 1), matching x.view(B, -1) of the module.
    return out[0, :B].reshape(B, 1)


def init_params(key, in_dim, hidden):
    """Deterministic synthetic parameters, PyTorch layout: W (out,in), b (out,)."""
    ks = jax.random.split(key, 6)

    def lin(kw, kb, fan_in, fan_out):
        bound = 1.0 / jnp.sqrt(fan_in)
        w = jax.random.uniform(kw, (fan_out, fan_in), jnp.float32, -bound, bound)
        b = jax.random.uniform(kb, (fan_out,), jnp.float32, -bound, bound)
        return w, b

    w1, b1 = lin(ks[0], ks[1], in_dim, hidden)
    w2, b2 = lin(ks[2], ks[3], hidden, hidden)
    w3, b3 = lin(ks[4], ks[5], hidden, 1)
    return (w1, b1, w2, b2, w3, b3)


if __name__ == "__main__":
    # Small shapes consistent with the module (x is (batch, in_dim)); batch is
    # sized so the tile heuristic yields 2 parallel grid steps (one per v7x TC,
    # overhead-amortizing 256-wide tiles on v5e/v6e).
    B, in_dim, hidden = 512, 32, 64

    key = jax.random.PRNGKey(0)
    kx, kp = jax.random.split(key)
    x = jax.random.normal(kx, (B, in_dim), dtype=jnp.float32)
    params = init_params(kp, in_dim, hidden)

    out = mine_critic_forward(x, params)
    out = jax.block_until_ready(out)
    assert out.shape == (B, 1)

    # Pure-JAX reference mirroring the kernel's precision policy
    # (bf16 matmul operands, f32 accumulation, f32 bias/ReLU/head epilogue).
    w1, b1, w2, b2, w3, b3 = params
    cd = jnp.bfloat16
    h1 = jnp.maximum(
        jnp.dot(x.astype(cd), w1.T.astype(cd),
                preferred_element_type=jnp.float32) + b1, 0.0)
    h2 = jnp.maximum(
        jnp.dot(h1.astype(cd), w2.T.astype(cd),
                preferred_element_type=jnp.float32) + b2, 0.0)
    ref = h2 @ w3.reshape(hidden, 1) + b3      # (B, 1); view(B, -1) is identity

    assert jnp.allclose(out, ref, atol=1e-2, rtol=1e-2), \
        float(jnp.max(jnp.abs(out - ref)))

    print("KERNEL_OK")
</pallas_src>

<mosaic_0001>
module attributes {stable_mosaic.version = 11 : i64} {
  func.func @mine_critic_kernel(%arg0: i32, %arg1: memref<256x32xf32, #tpu.memory_space<vmem>>, %arg2: memref<64x32xbf16, #tpu.memory_space<vmem>>, %arg3: memref<64x64xbf16, #tpu.memory_space<vmem>>, %arg4: memref<64x4xf32, #tpu.memory_space<vmem>>, %arg5: memref<1xf32, #tpu.memory_space<smem>>, %arg6: memref<1x256xf32, #tpu.memory_space<vmem>>) attributes {dimension_semantics = [#tpu.dimension_semantics<parallel>], iteration_bounds = array<i64: 2>, scalar_prefetch = 0 : i64, scratch_operands = 0 : i64, tpu.core_type = #tpu.core_type<tc>, window_params = [{transform_indices = @transform_0, window_bounds = array<i64: 256, 32>}, {pipeline_mode = #tpu.pipeline_mode<synchronous>, transform_indices = @transform_1, window_bounds = array<i64: 64, 32>}, {pipeline_mode = #tpu.pipeline_mode<synchronous>, transform_indices = @transform_2, window_bounds = array<i64: 64, 64>}, {pipeline_mode = #tpu.pipeline_mode<synchronous>, transform_indices = @transform_3, window_bounds = array<i64: 64, 4>}, {transform_indices = @transform_4, window_bounds = array<i64: 1>}, {transform_indices = @transform_5, window_bounds = array<i64: 1, 256>}]} {
    %c0 = arith.constant 0 : index
    %c0_0 = arith.constant 0 : index
    %0 = vector.load %arg1[%c0, %c0_0] : memref<256x32xf32, #tpu.memory_space<vmem>>, vector<256x32xf32>
    %1 = arith.truncf %0 : vector<256x32xf32> to vector<256x32xbf16>
    %c0_1 = arith.constant 0 : index
    %c0_2 = arith.constant 0 : index
    %2 = vector.load %arg4[%c0_1, %c0_2] : memref<64x4xf32, #tpu.memory_space<vmem>>, vector<64x4xf32>
    %3 = vector.extract_strided_slice %2 {offsets = [0, 0], sizes = [64, 1], strides = [1, 1]} : vector<64x4xf32> to vector<64x1xf32>
    %4 = vector.extract_strided_slice %2 {offsets = [0, 1], sizes = [64, 1], strides = [1, 1]} : vector<64x4xf32> to vector<64x1xf32>
    %5 = vector.extract_strided_slice %2 {offsets = [0, 2], sizes = [64, 1], strides = [1, 1]} : vector<64x4xf32> to vector<64x1xf32>
    %c0_3 = arith.constant 0 : index
    %c0_4 = arith.constant 0 : index
    %6 = vector.load %arg2[%c0_3, %c0_4] : memref<64x32xbf16, #tpu.memory_space<vmem>>, vector<64x32xbf16>
    %cst = arith.constant dense<0.000000e+00> : vector<64x256xf32>
    %7 = tpu.matmul %6, %1, %cst {dimension_numbers = #tpu.dot_dimension_numbers<[1], [1], [0], [0], [0, 0, 1, 0], [], []>} : vector<64x32xbf16>, vector<256x32xbf16>, vector<64x256xf32> -> vector<64x256xf32>
    %8 = vector.broadcast %3 : vector<64x1xf32> to vector<64x256xf32>
    %9 = arith.addf %7, %8 : vector<64x256xf32>
    %cst_5 = arith.constant 0.000000e+00 : f32
    %10 = vector.broadcast %cst_5 : f32 to vector<64x256xf32>
    %11 = arith.maximumf %9, %10 : vector<64x256xf32>
    %c0_6 = arith.constant 0 : index
    %c0_7 = arith.constant 0 : index
    %12 = vector.load %arg3[%c0_6, %c0_7] : memref<64x64xbf16, #tpu.memory_space<vmem>>, vector<64x64xbf16>
    %13 = arith.truncf %11 : vector<64x256xf32> to vector<64x256xbf16>
    %cst_8 = arith.constant dense<0.000000e+00> : vector<64x256xf32>
    %14 = tpu.matmul %12, %13, %cst_8 {dimension_numbers = #tpu.dot_dimension_numbers<[1], [0], [0], [1], [0, 0, 1, 1], [], []>} : vector<64x64xbf16>, vector<64x256xbf16>, vector<64x256xf32> -> vector<64x256xf32>
    %15 = vector.broadcast %4 : vector<64x1xf32> to vector<64x256xf32>
    %16 = arith.addf %14, %15 : vector<64x256xf32>
    %cst_9 = arith.constant 0.000000e+00 : f32
    %17 = vector.broadcast %cst_9 : f32 to vector<64x256xf32>
    %18 = arith.maximumf %16, %17 : vector<64x256xf32>
    %19 = vector.broadcast %5 : vector<64x1xf32> to vector<64x256xf32>
    %20 = arith.mulf %18, %19 : vector<64x256xf32>
    %cst_10 = arith.constant dense<0.000000e+00> : vector<256xf32>
    %21 = vector.multi_reduction <add>, %20, %cst_10 [0] : vector<64x256xf32> to vector<256xf32>
    %22 = vector.shape_cast %21 : vector<256xf32> to vector<1x256xf32>
    %c0_11 = arith.constant 0 : index
    %23 = memref.load %arg5[%c0_11] : memref<1xf32, #tpu.memory_space<smem>>
    %24 = vector.broadcast %23 : f32 to vector<1x256xf32>
    %25 = arith.addf %22, %24 : vector<1x256xf32>
    %c0_12 = arith.constant 0 : index
    %c0_13 = arith.constant 0 : index
    %26 = vector.load %arg6[%c0_12, %c0_13] : memref<1x256xf32, #tpu.memory_space<vmem>>, vector<1x256xf32>
    tpu.vector_store %arg6[%c0_12, %c0_13], %25 {strides = array<i32>} : memref<1x256xf32, #tpu.memory_space<vmem>>, vector<1x256xf32>,
    return
  }
  func.func @transform_0(%arg0: i32) -> (i32, i32) {
    %c0_i32 = arith.constant 0 : i32
    %c0_i32_0 = arith.constant 0 : i32
    return %arg0, %c0_i32 : i32, i32
  }
  func.func @transform_1(%arg0: i32) -> (i32, i32) {
    %c0_i32 = arith.constant 0 : i32
    %c0_i32_0 = arith.constant 0 : i32
    %c0_i32_1 = arith.constant 0 : i32
    return %c0_i32, %c0_i32_0 : i32, i32
  }
  func.func @transform_2(%arg0: i32) -> (i32, i32) {
    %c0_i32 = arith.constant 0 : i32
    %c0_i32_0 = arith.constant 0 : i32
    %c0_i32_1 = arith.constant 0 : i32
    return %c0_i32, %c0_i32_0 : i32, i32
  }
  func.func @transform_3(%arg0: i32) -> (i32, i32) {
    %c0_i32 = arith.constant 0 : i32
    %c0_i32_0 = arith.constant 0 : i32
    %c0_i32_1 = arith.constant 0 : i32
    return %c0_i32, %c0_i32_0 : i32, i32
  }
  func.func @transform_4(%arg0: i32) -> i32 {
    %c0_i32 = arith.constant 0 : i32
    %c0_i32_0 = arith.constant 0 : i32
    return %c0_i32 : i32
  }
  func.func @transform_5(%arg0: i32) -> (i32, i32) {
    %c0_i32 = arith.constant 0 : i32
    %c0_i32_0 = arith.constant 0 : i32
    return %c0_i32, %arg0 : i32, i32
  }
}

</mosaic_0001>

<llo_original>
// kernel: tpu_custom_call.1
$region0: #{tpu_custom_call.1}
  #allocation0 [shape = 'u32[]', space=smem, size = 0x4, offset = 0x4, fixed_abs, tag = 'smem constant byte address 0x4 - core index']
  #allocation1 [shape = 'u32[72,128]{1,0:T(1,128)}', space=vmem, size = 0x9000, scoped, tag = 'internal scratch']
  #allocation2 [shape = 'f32[1]{0:T(128)S(6)}', space=smem, size = 0x200, scoped, tag = 'scoped memory for tpu_custom_call.1']
  %s0 = inlined_call_operand.vmem [shape: f32[512,32], index: 0, kind: input, shape index: {}]
  %s1 = inlined_call_operand.vmem [shape: bf16[64,32], index: 1, kind: input, shape index: {}]
  %s2 = inlined_call_operand.vmem [shape: bf16[64,64], index: 2, kind: input, shape index: {}]
  %s3 = inlined_call_operand.vmem [shape: f32[64,4], index: 3, kind: input, shape index: {}]
  %s4 = inlined_call_operand.<no memory space> [shape: f32[1], index: 4, kind: input, shape index: {}]
  %s5 = inlined_call_operand.hbm [shape: f32[1,512], index: 5, kind: output, shape index: {}]
  %s6 = sld [smem:[#allocation0]]
  $region53: #{tpu_custom_call.1} parent=0
    _
  %s8 = ssub.s32 1, %s6
  %s9 = scalar_select 0, %s8, %s6
  %10 = sst [smem:[#allocation2]] %s4
  $region1: #{tpu_custom_call.1} parent=0
    #allocation3 [shape = 'u8[2048]{0}', space=vmem, size = 0x800, scoped, tag = 'output window, operand 0']
    #allocation4 [shape = 's32[2]{0}', space=sflag, size = 0x8, scoped, tag = 'scoped memory for tpu_custom_call.1']
    %11 = vsyncpa [#allocation4], 0
    %s12 = scalar_lea.sflag [#allocation4], 1
    %13 = vsyncpa %s12, 0
    loop: start=0, step=1, limit=4
    $region2: #{tpu_custom_call.1} parent=1 // loop_pre_header
      _
    $region3: #{tpu_custom_call.1} parent=1 // loop_header
      %s15 = sphi 0, %s19
      %p16 = scmp.ge.s32.totalorder %s15, 4
      %s25 = sphi 0, %s27
      %s28 = sphi 0, %s25
      %s29 = sphi 0, %s28
      %s45 = sphi 0, %s29
      %s49 = sphi 0, %s49
      %s51 = sphi 0, %s49
      %s52 = sphi 0, %s51
      %s66 = sphi 0, %s52
      %s70 = sphi 0, %s70
      %s72 = sphi 0, %s70
      %s73 = sphi 0, %s72
      %s87 = sphi 0, %s73
      %s91 = sphi 0, %s91
      %s93 = sphi 0, %s91
      %s94 = sphi 0, %s93
      %s108 = sphi 0, %s94
      %s112 = sphi 0, %s112
      %s114 = sphi 0, %s112
      %s115 = sphi 0, %s114
      %s129 = sphi 0, %s115
      %s135 = sphi 0, %s137
      %s138 = sphi 0, %s135
      %s139 = sphi 0, %s138
      %s155 = sphi 0, %s139
    $region4: #{tpu_custom_call.1} parent=1 // loop_header_branch
      %18 = sbr.rel (%p16) target = $region8
    $region5: #{tpu_custom_call.1} parent=1 // loop_body
      %s20 = ssub.s32 %s15, 1
      %s21 = ssub.s32 %s15, 2
      %s22 = sadd.s32 %s15, 1
      %s23 = ssub.s32 %s15, %s22
      %p24 = scmp.eq.s32.totalorder %s23, 0
      %s26 = sadd.s32 %s25, 1
      %s27 = scalar_select %p24, %s25, %s26
      %p30 = pneg %p24
      %p31 = scmp.eq.s32.totalorder %s15, 1
      %p32 = por %p30, %p31
      %p33 = scmp.ne.s32.totalorder %s25, %s28
      %p34 = scmp.eq.s32.totalorder %s15, 0
      %p35 = por %p33, %p34
      %p36 = scmp.ne.s32.totalorder %s25, %s28
      %p37 = scmp.eq.s32.totalorder %s20, 1
      %p38 = por %p36, %p37
      %p39 = scmp.ne.s32.totalorder %s28, %s29
      %p40 = scmp.eq.s32.totalorder %s20, 0
      %p41 = por %p39, %p40
      %p42 = scmp.ne.s32.totalorder %s28, %s29
      %p43 = scmp.eq.s32.totalorder %s21, 1
      %p44 = por %p42, %p43
      %p46 = scmp.ne.s32.totalorder %s29, %s45
      %p47 = scmp.eq.s32.totalorder %s21, 0
      %p48 = por %p46, %p47
      %s50 = sadd.s32 %s49, 1
      %p53 = scmp.eq.s32.totalorder %s15, 1
      %p54 = scmp.ne.s32.totalorder %s49, %s51
      %p55 = scmp.eq.s32.totalorder %s15, 0
      %p56 = por %p54, %p55
      %p57 = scmp.ne.s32.totalorder %s49, %s51
      %p58 = scmp.eq.s32.totalorder %s20, 1
      %p59 = por %p57, %p58
      %p60 = scmp.ne.s32.totalorder %s51, %s52
      %p61 = scmp.eq.s32.totalorder %s20, 0
      %p62 = por %p60, %p61
      %p63 = scmp.ne.s32.totalorder %s51, %s52
      %p64 = scmp.eq.s32.totalorder %s21, 1
      %p65 = por %p63, %p64
      %p67 = scmp.ne.s32.totalorder %s52, %s66
      %p68 = scmp.eq.s32.totalorder %s21, 0
      %p69 = por %p67, %p68
      %s71 = sadd.s32 %s70, 1
      %p74 = scmp.eq.s32.totalorder %s15, 1
      %p75 = scmp.ne.s32.totalorder %s70, %s72
      %p76 = scmp.eq.s32.totalorder %s15, 0
      %p77 = por %p75, %p76
      %p78 = scmp.ne.s32.totalorder %s70, %s72
      %p79 = scmp.eq.s32.totalorder %s20, 1
      %p80 = por %p78, %p79
      %p81 = scmp.ne.s32.totalorder %s72, %s73
      %p82 = scmp.eq.s32.totalorder %s20, 0
      %p83 = por %p81, %p82
      %p84 = scmp.ne.s32.totalorder %s72, %s73
      %p85 = scmp.eq.s32.totalorder %s21, 1
      %p86 = por %p84, %p85
      %p88 = scmp.ne.s32.totalorder %s73, %s87
      %p89 = scmp.eq.s32.totalorder %s21, 0
      %p90 = por %p88, %p89
      %s92 = sadd.s32 %s91, 1
      %p95 = scmp.eq.s32.totalorder %s15, 1
      %p96 = scmp.ne.s32.totalorder %s91, %s93
      %p97 = scmp.eq.s32.totalorder %s15, 0
      %p98 = por %p96, %p97
      %p99 = scmp.ne.s32.totalorder %s91, %s93
      %p100 = scmp.eq.s32.totalorder %s20, 1
      %p101 = por %p99, %p100
      %p102 = scmp.ne.s32.totalorder %s93, %s94
      %p103 = scmp.eq.s32.totalorder %s20, 0
      %p104 = por %p102, %p103
      %p105 = scmp.ne.s32.totalorder %s93, %s94
      %p106 = scmp.eq.s32.totalorder %s21, 1
      %p107 = por %p105, %p106
      %p109 = scmp.ne.s32.totalorder %s94, %s108
      %p110 = scmp.eq.s32.totalorder %s21, 0
      %p111 = por %p109, %p110
      %s113 = sadd.s32 %s112, 1
      %p116 = scmp.eq.s32.totalorder %s15, 1
      %p117 = scmp.ne.s32.totalorder %s112, %s114
      %p118 = scmp.eq.s32.totalorder %s15, 0
      %p119 = por %p117, %p118
      %p120 = scmp.ne.s32.totalorder %s112, %s114
      %p121 = scmp.eq.s32.totalorder %s20, 1
      %p122 = por %p120, %p121
      %p123 = scmp.ne.s32.totalorder %s114, %s115
      %p124 = scmp.eq.s32.totalorder %s20, 0
      %p125 = por %p123, %p124
      %p126 = scmp.ne.s32.totalorder %s114, %s115
      %p127 = scmp.eq.s32.totalorder %s21, 1
      %p128 = por %p126, %p127
      %p130 = scmp.ne.s32.totalorder %s115, %s129
      %p131 = scmp.eq.s32.totalorder %s21, 0
      %p132 = por %p130, %p131
      %s133 = ssub.s32 %s15, %s22
      %p134 = scmp.eq.s32.totalorder %s133, 0
      %s136 = sadd.s32 %s135, 1
      %s137 = scalar_select %p134, %s135, %s136
      %p140 = pneg %p134
      %p141 = scmp.eq.s32.totalorder %s15, 1
      %p142 = por %p140, %p141
      %p143 = scmp.ne.s32.totalorder %s135, %s138
      %p144 = scmp.eq.s32.totalorder %s15, 0
      %p145 = por %p143, %p144
      %p146 = scmp.ne.s32.totalorder %s135, %s138
      %p147 = scmp.eq.s32.totalorder %s20, 1
      %p148 = por %p146, %p147
      %p149 = scmp.ne.s32.totalorder %s138, %s139
      %p150 = scmp.eq.s32.totalorder %s20, 0
      %p151 = por %p149, %p150
      %p152 = scmp.ne.s32.totalorder %s138, %s139
      %p153 = scmp.eq.s32.totalorder %s21, 1
      %p154 = por %p152, %p153
      %p156 = scmp.ne.s32.totalorder %s139, %s155
      %p157 = scmp.eq.s32.totalorder %s21, 0
      %p158 = por %p156, %p157
      %p159 = scmp.le.s32.totalorder 1, %s15
      %p160 = scmp.lt.s32.totalorder %s15, 3
      %p161 = pnand %p159, %p160
      %p162 = pneg %p161
      // Predicated region
      $region9: #{tpu_custom_call.1} parent=5 // pred_check
        _
      $region10: #{tpu_custom_call.1} parent=5 // pred_check_branch
        %164 = sbr.rel (%p161) target = $region12
      $region11: #{tpu_custom_call.1} parent=5 // pred_region
        %s165 = ssub.s32 %s15, 1
        // Predicated region
        $region13: #{tpu_custom_call.1} parent=11 // pred_check
          %p166 = pneg %p62
        $region14: #{tpu_custom_call.1} parent=11 // pred_check_branch
          %168 = sbr.rel (%p166) target = $region16
        $region15: #{tpu_custom_call.1} parent=11 // pred_region
          _
        $region16: #{tpu_custom_call.1} parent=11 // pred_fallthru
          _
        // Predicated region
        $region17: #{tpu_custom_call.1} parent=11 // pred_check
          %p169 = pneg %p83
        $region18: #{tpu_custom_call.1} parent=11 // pred_check_branch
          %171 = sbr.rel (%p169) target = $region20
        $region19: #{tpu_custom_call.1} parent=11 // pred_region
          _
        $region20: #{tpu_custom_call.1} parent=11 // pred_fallthru
          _
        // Predicated region
        $region21: #{tpu_custom_call.1} parent=11 // pred_check
          %p172 = pneg %p104
        $region22: #{tpu_custom_call.1} parent=11 // pred_check_branch
          %174 = sbr.rel (%p172) target = $region24
        $region23: #{tpu_custom_call.1} parent=11 // pred_region
          _
        $region24: #{tpu_custom_call.1} parent=11 // pred_fallthru
          _
        // Predicated region
        $region25: #{tpu_custom_call.1} parent=11 // pred_check
          %p175 = pneg %p125
        $region26: #{tpu_custom_call.1} parent=11 // pred_check_branch
          %177 = sbr.rel (%p175) target = $region28
        $region27: #{tpu_custom_call.1} parent=11 // pred_region
          _
        $region28: #{tpu_custom_call.1} parent=11 // pred_fallthru
          _
      $region12: #{tpu_custom_call.1} parent=5 // pred_fallthru
        _
      %p178 = scmp.lt.s32.totalorder %s15, 2
      // Predicated region
      $region29: #{tpu_custom_call.1} parent=5 // pred_check
        %p179 = pneg %p178
      $region30: #{tpu_custom_call.1} parent=5 // pred_check_branch
        %181 = sbr.rel (%p179) target = $region32
      $region31: #{tpu_custom_call.1} parent=5 // pred_region
        // Predicated region
        $region33: #{tpu_custom_call.1} parent=31 // pred_check
          %p182 = pneg %p35
        $region34: #{tpu_custom_call.1} parent=31 // pred_check_branch
          %184 = sbr.rel (%p182) target = $region36
        $region35: #{tpu_custom_call.1} parent=31 // pred_region
          %s185 = smul.u32 32, %s15
          %p186 = scmp.lt.s32.totalorder %s185, 63
          %s187 = scalar_select %p186, %s185, 63
          %s188 = smul.addr %s187, 8
          %s189 = scalar_lea.vmem %s0, %s188
          %s190 = smul.u32 32, %s15
        $region36: #{tpu_custom_call.1} parent=31 // pred_fallthru
          _
      $region32: #{tpu_custom_call.1} parent=5 // pred_fallthru
        _
      %p191 = scmp.le.s32.totalorder 1, %s15
      %p192 = scmp.lt.s32.totalorder %s15, 3
      %p193 = pnand %p191, %p192
      %p194 = pneg %p193
      // Predicated region
      $region37: #{tpu_custom_call.1} parent=5 // pred_check
        _
      $region38: #{tpu_custom_call.1} parent=5 // pred_check_branch
        %196 = sbr.rel (%p193) target = $region40
      $region39: #{tpu_custom_call.1} parent=5 // pred_region
        %s197 = ssub.s32 %s15, 1
        %s198 = smul.u32 32, %s20
        %p199 = scmp.lt.s32.totalorder %s198, 63
        %s200 = scalar_select %p199, %s198, 63
        %s201 = smul.addr %s200, 8
        %s202 = scalar_lea.vmem %s0, %s201
        %p203 = pneg %p41
        %p204 = pneg %p38
        %p205 = pneg %p62
        %p206 = pneg %p59
        %p207 = pneg %p83
        %p208 = pneg %p80
        %p209 = pneg %p104
        %p210 = pneg %p101
        %p211 = pneg %p125
        %p212 = pneg %p122
        %p213 = pneg %p151
        %p214 = pneg %p148
        %s215 = sand.u32 %s138, 1
        %s216 = scalar_lea.sflag [#allocation4], %s215
        %s217 = sand.u32 %s138, 1
        %s218 = smul.addr %s217, 2
        %s219 = scalar_lea.vmem [#allocation3], %s218
        %s220 = smul.u32 32, %s20
        %p221 = scmp.lt.s32.totalorder %s220, 63
        %s222 = scalar_select %p221, %s220, 63
        %s223 = smul.addr %s222, 8
        %s224 = scalar_lea.vmem %s0, %s223
        %s225 = smul.u32 32, %s20
        %s226 = smul.u32 2, %s20
        %v228 = vld [vmem:[%s224] sm:$0xff]
        %v229 = vld [vmem:[%s224 + $0x8] sm:$0xff]
        %v230 = vld [vmem:[%s224 + $0x10] sm:$0xff]
        %v231 = vld [vmem:[%s224 + $0x18] sm:$0xff]
        %v232 = vld [vmem:[%s224 + $0x20] sm:$0xff]
        %v233 = vld [vmem:[%s224 + $0x28] sm:$0xff]
        %v234 = vld [vmem:[%s224 + $0x30] sm:$0xff]
        %v235 = vld [vmem:[%s224 + $0x38] sm:$0xff]
        %v236 = vld [vmem:[%s224 + $0x40] sm:$0xff]
        %v237 = vld [vmem:[%s224 + $0x48] sm:$0xff]
        %v238 = vld [vmem:[%s224 + $0x50] sm:$0xff]
        %v239 = vld [vmem:[%s224 + $0x58] sm:$0xff]
        %v240 = vld [vmem:[%s224 + $0x60] sm:$0xff]
        %v241 = vld [vmem:[%s224 + $0x68] sm:$0xff]
        %v242 = vld [vmem:[%s224 + $0x70] sm:$0xff]
        %v243 = vld [vmem:[%s224 + $0x78] sm:$0xff]
        %v244 = vld [vmem:[%s224 + $0x80] sm:$0xff]
        %v245 = vld [vmem:[%s224 + $0x88] sm:$0xff]
        %v246 = vld [vmem:[%s224 + $0x90] sm:$0xff]
        %v247 = vld [vmem:[%s224 + $0x98] sm:$0xff]
        %v248 = vld [vmem:[%s224 + $0xa0] sm:$0xff]
        %v249 = vld [vmem:[%s224 + $0xa8] sm:$0xff]
        %v250 = vld [vmem:[%s224 + $0xb0] sm:$0xff]
        %v251 = vld [vmem:[%s224 + $0xb8] sm:$0xff]
        %v252 = vld [vmem:[%s224 + $0xc0] sm:$0xff]
        %v253 = vld [vmem:[%s224 + $0xc8] sm:$0xff]
        %v254 = vld [vmem:[%s224 + $0xd0] sm:$0xff]
        %v255 = vld [vmem:[%s224 + $0xd8] sm:$0xff]
        %v256 = vld [vmem:[%s224 + $0xe0] sm:$0xff]
        %v257 = vld [vmem:[%s224 + $0xe8] sm:$0xff]
        %v258 = vld [vmem:[%s224 + $0xf0] sm:$0xff]
        %v259 = vld [vmem:[%s224 + $0xf8] sm:$0xff]
        %v260 = vpack.c.bf16 %v229, %v228
        %v261 = vpack.c.bf16 %v231, %v230
        %v262 = vpack.c.bf16 %v233, %v232
        %v263 = vpack.c.bf16 %v235, %v234
        %v264 = vpack.c.bf16 %v237, %v236
        %v265 = vpack.c.bf16 %v239, %v238
        %v266 = vpack.c.bf16 %v241, %v240
        %v267 = vpack.c.bf16 %v243, %v242
        %v268 = vpack.c.bf16 %v245, %v244
        %v269 = vpack.c.bf16 %v247, %v246
        %v270 = vpack.c.bf16 %v249, %v248
        %v271 = vpack.c.bf16 %v251, %v250
        %v272 = vpack.c.bf16 %v253, %v252
        %v273 = vpack.c.bf16 %v255, %v254
        %v274 = vpack.c.bf16 %v257, %v256
        %v275 = vpack.c.bf16 %v259, %v258
        %v276 = vld [vmem:[%s3] sm:$0xff]
        %v277 = vld [vmem:[%s3 + $0x8] sm:$0xff]
        %v278 = vld [vmem:[%s3 + $0x10] sm:$0xff]
        %v279 = vld [vmem:[%s3 + $0x18] sm:$0xff]
        %v280 = vld [vmem:[%s3 + $0x20] sm:$0xff]
        %v281 = vld [vmem:[%s3 + $0x28] sm:$0xff]
        %v282 = vld [vmem:[%s3 + $0x30] sm:$0xff]
        %v283 = vld [vmem:[%s3 + $0x38] sm:$0xff]
        %v284 = vld [vmem:[%s1] sm:$0xf]
        %v285 = vld [vmem:[%s1 + $0x4] sm:$0xf]
        %v286 = vld [vmem:[%s1 + $0x8] sm:$0xf]
        %v287 = vld [vmem:[%s1 + $0xc] sm:$0xf]
        %v288 = vld [vmem:[%s1 + $0x10] sm:$0xf]
        %v289 = vld [vmem:[%s1 + $0x14] sm:$0xf]
        %v290 = vld [vmem:[%s1 + $0x18] sm:$0xf]
        %v291 = vld [vmem:[%s1 + $0x1c] sm:$0xf]
        %293 = vset.pattern.permute.xlu0 0
        %294 = vperm.xlu0 %293, %v276
        %v295 = vpop.permute.xlu0 %294
        %298 = vset.pattern.permute.xlu0 0
        %299 = vperm.xlu0 %298, %v277
        %v300 = vpop.permute.xlu0 %299
        %303 = vset.pattern.permute.xlu0 0
        %304 = vperm.xlu0 %303, %v278
        %v305 = vpop.permute.xlu0 %304
        %308 = vset.pattern.permute.xlu0 0
        %309 = vperm.xlu0 %308, %v279
        %v310 = vpop.permute.xlu0 %309
        %313 = vset.pattern.permute.xlu0 0
        %314 = vperm.xlu0 %313, %v280
        %v315 = vpop.permute.xlu0 %314
        %318 = vset.pattern.permute.xlu0 0
        %319 = vperm.xlu0 %318, %v281
        %v320 = vpop.permute.xlu0 %319
        %323 = vset.pattern.permute.xlu0 0
        %324 = vperm.xlu0 %323, %v282
        %v325 = vpop.permute.xlu0 %324
        %328 = vset.pattern.permute.xlu0 0
        %329 = vperm.xlu0 %328, %v283
        %v330 = vpop.permute.xlu0 %329
        %v340 = vunpack.c.l.b16 %v284
        %v341 = vunpack.c.l.b16 %v285
        %v342 = vunpack.c.l.b16 %v286
        %v343 = vunpack.c.l.b16 %v287
        %v344 = vunpack.c.l.b16 %v288
        %v345 = vunpack.c.l.b16 %v289
        %v346 = vunpack.c.l.b16 %v290
        %v347 = vunpack.c.l.b16 %v291
        %v348 = vpack.c.b16 %v341, %v340
        %v349 = vpack.c.b16 %v343, %v342
        %v350 = vpack.c.b16 %v345, %v344
        %v351 = vpack.c.b16 %v347, %v346
        %vm352 = vcmask 261120
        %v354 = vsel %vm352, %v348, 0
        %v357 = vsel %vm352, %v349, 0
        %v360 = vsel %vm352, %v350, 0
        %v363 = vsel %vm352, %v351, 0
        %v366 = vsel %vm352, %v260, 0
        %v369 = vsel %vm352, %v261, 0
        %v372 = vsel %vm352, %v262, 0
        %v375 = vsel %vm352, %v263, 0
        %v378 = vsel %vm352, %v264, 0
        %v381 = vsel %vm352, %v265, 0
        %v384 = vsel %vm352, %v266, 0
        %v387 = vsel %vm352, %v267, 0
        %v390 = vsel %vm352, %v268, 0
        %v393 = vsel %vm352, %v269, 0
        %v396 = vsel %vm352, %v270, 0
        %v399 = vsel %vm352, %v271, 0
        %v402 = vsel %vm352, %v272, 0
        %v405 = vsel %vm352, %v273, 0
        %v408 = vsel %vm352, %v274, 0
        %v411 = vsel %vm352, %v275, 0
        %413 = vmatpush.bf16.xpose.msra.mxu0 %v387
        %414 = vmatpush.bf16.xpose.msra.mxu0 %v384
        %415 = vmatpush.bf16.xpose.msra.mxu0 %v381
        %416 = vmatpush.bf16.xpose.msra.mxu0 %v378
        %417 = vmatpush.bf16.xpose.msra.mxu0 %v375
        %418 = vmatpush.bf16.xpose.msra.mxu0 %v372
        %419 = vmatpush.bf16.xpose.msra.mxu0 %v369
        %420 = vmatpush.bf16.xpose.msra.mxu0 %v366
        %421 = vmatmul.bf16.gmra.mxu0 %v354
        %v422 = vpop.f32.mrf.mxu0
        %v423 = vadd.f32 %v295, %v422
        %v424 = vpop.f32.mrf.mxu0
        %v425 = vadd.f32 %v300, %v424
        %426 = vmatmul.bf16.gmra.mxu0 %v357
        %v427 = vpop.f32.mrf.mxu0
        %v428 = vadd.f32 %v305, %v427
        %v429 = vpop.f32.mrf.mxu0
        %v430 = vadd.f32 %v310, %v429
        %431 = vmatmul.bf16.gmra.mxu0 %v360
        %v432 = vpop.f32.mrf.mxu0
        %v433 = vadd.f32 %v315, %v432
        %v434 = vpop.f32.mrf.mxu0
        %v435 = vadd.f32 %v320, %v434
        %436 = vmatmul.bf16.gmra.mxu0 %v363
        %v437 = vpop.f32.mrf.mxu0
        %v438 = vadd.f32 %v325, %v437
        %v439 = vpop.f32.mrf.mxu0
        %v440 = vadd.f32 %v330, %v439
        %441 = vdwg.mxu0
        %442 = vmatpush.bf16.xpose.msra.mxu0 %v411
        %443 = vmatpush.bf16.xpose.msra.mxu0 %v408
        %444 = vmatpush.bf16.xpose.msra.mxu0 %v405
        %445 = vmatpush.bf16.xpose.msra.mxu0 %v402
        %446 = vmatpush.bf16.xpose.msra.mxu0 %v399
        %447 = vmatpush.bf16.xpose.msra.mxu0 %v396
        %448 = vmatpush.bf16.xpose.msra.mxu0 %v393
        %449 = vmatpush.bf16.xpose.msra.mxu0 %v390
        %450 = vmatmul.bf16.gmra.mxu0 %v354
        %v451 = vpop.f32.mrf.mxu0
        %v452 = vadd.f32 %v295, %v451
        %v453 = vpop.f32.mrf.mxu0
        %v454 = vadd.f32 %v300, %v453
        %455 = vmatmul.bf16.gmra.mxu0 %v357
        %v456 = vpop.f32.mrf.mxu0
        %v457 = vadd.f32 %v305, %v456
        %v458 = vpop.f32.mrf.mxu0
        %v459 = vadd.f32 %v310, %v458
        %460 = vmatmul.bf16.gmra.mxu0 %v360
        %v461 = vpop.f32.mrf.mxu0
        %v462 = vadd.f32 %v315, %v461
        %v463 = vpop.f32.mrf.mxu0
        %v464 = vadd.f32 %v320, %v463
        %465 = vmatmul.bf16.gmra.mxu0 %v363
        %v466 = vpop.f32.mrf.mxu0
        %v467 = vadd.f32 %v325, %v466
        %v468 = vpop.f32.mrf.mxu0
        %v469 = vadd.f32 %v330, %v468
        %470 = vdwg.mxu0
        %v471 = vmax.f32 %v423, 0.0
        %v472 = vmax.f32 %v452, 0.0
        %v473 = vmax.f32 %v425, 0.0
        %v474 = vmax.f32 %v454, 0.0
        %v475 = vmax.f32 %v428, 0.0
        %v476 = vmax.f32 %v457, 0.0
        %v477 = vmax.f32 %v430, 0.0
        %v478 = vmax.f32 %v459, 0.0
        %v479 = vmax.f32 %v433, 0.0
        %v480 = vmax.f32 %v462, 0.0
        %v481 = vmax.f32 %v435, 0.0
        %v482 = vmax.f32 %v464, 0.0
        %v483 = vmax.f32 %v438, 0.0
        %v484 = vmax.f32 %v467, 0.0
        %v485 = vmax.f32 %v440, 0.0
        %v486 = vmax.f32 %v469, 0.0
        %v487 = vld [vmem:[%s2] sm:$0xf]
        %v488 = vld [vmem:[%s2 + $0x4] sm:$0xf]
        %v489 = vld [vmem:[%s2 + $0x8] sm:$0xf]
        %v490 = vld [vmem:[%s2 + $0xc] sm:$0xf]
        %v491 = vld [vmem:[%s2 + $0x10] sm:$0xf]
        %v492 = vld [vmem:[%s2 + $0x14] sm:$0xf]
        %v493 = vld [vmem:[%s2 + $0x18] sm:$0xf]
        %v494 = vld [vmem:[%s2 + $0x1c] sm:$0xf]
        %v495 = vpack.c.bf16 %v473, %v471
        %v496 = vpack.c.bf16 %v474, %v472
        %v497 = vpack.c.bf16 %v477, %v475
        %v498 = vpack.c.bf16 %v478, %v476
        %v499 = vpack.c.bf16 %v481, %v479
        %v500 = vpack.c.bf16 %v482, %v480
        %v501 = vpack.c.bf16 %v485, %v483
        %v502 = vpack.c.bf16 %v486, %v484
        %503 = vset.pattern.permute.xlu0 1
        %504 = vperm.xlu0 %503, %v276
        %v505 = vpop.permute.xlu0 %504
        %507 = vset.pattern.permute.xlu0 1
        %508 = vperm.xlu0 %507, %v277
        %v509 = vpop.permute.xlu0 %508
        %511 = vset.pattern.permute.xlu0 1
        %512 = vperm.xlu0 %511, %v278
        %v513 = vpop.permute.xlu0 %512
        %515 = vset.pattern.permute.xlu0 1
        %516 = vperm.xlu0 %515, %v279
        %v517 = vpop.permute.xlu0 %516
        %519 = vset.pattern.permute.xlu0 1
        %520 = vperm.xlu0 %519, %v280
        %v521 = vpop.permute.xlu0 %520
        %523 = vset.pattern.permute.xlu0 1
        %524 = vperm.xlu0 %523, %v281
        %v525 = vpop.permute.xlu0 %524
        %527 = vset.pattern.permute.xlu0 1
        %528 = vperm.xlu0 %527, %v282
        %v529 = vpop.permute.xlu0 %528
        %531 = vset.pattern.permute.xlu0 1
        %532 = vperm.xlu0 %531, %v283
        %v533 = vpop.permute.xlu0 %532
        %v543 = vunpack.c.l.b16 %v487
        %v544 = vunpack.c.l.b16 %v488
        %v545 = vunpack.c.l.b16 %v489
        %v546 = vunpack.c.l.b16 %v490
        %v547 = vunpack.c.l.b16 %v491
        %v548 = vunpack.c.l.b16 %v492
        %v549 = vunpack.c.l.b16 %v493
        %v550 = vunpack.c.l.b16 %v494
        %v551 = vpack.c.b16 %v544, %v543
        %v552 = vpack.c.b16 %v546, %v545
        %v553 = vpack.c.b16 %v548, %v547
        %v554 = vpack.c.b16 %v550, %v549
        %vm555 = vcmask 523264
        %v557 = vsel %vm555, %v551, 0
        %v560 = vsel %vm555, %v552, 0
        %v563 = vsel %vm555, %v553, 0
        %v566 = vsel %vm555, %v554, 0
        %568 = vmatpush.bf16.msra.mxu0 0
        %569 = vmatpush.bf16.msra.mxu0 0
        %570 = vmatpush.bf16.msra.mxu0 0
        %571 = vmatpush.bf16.msra.mxu0 0
        %572 = vmatpush.bf16.msra.mxu0 %v501
        %573 = vmatpush.bf16.msra.mxu0 %v499
        %574 = vmatpush.bf16.msra.mxu0 %v497
        %575 = vmatpush.bf16.msra.mxu0 %v495
        %576 = vmatmul.bf16.gmra.mxu0 %v557
        %v577 = vpop.f32.mrf.mxu0
        %v578 = vadd.f32 %v505, %v577
        %v579 = vpop.f32.mrf.mxu0
        %v580 = vadd.f32 %v509, %v579
        %581 = vmatmul.bf16.gmra.mxu0 %v560
        %v582 = vpop.f32.mrf.mxu0
        %v583 = vadd.f32 %v513, %v582
        %v584 = vpop.f32.mrf.mxu0
        %v585 = vadd.f32 %v517, %v584
        %586 = vmatmul.bf16.gmra.mxu0 %v563
        %v587 = vpop.f32.mrf.mxu0
        %v588 = vadd.f32 %v521, %v587
        %v589 = vpop.f32.mrf.mxu0
        %v590 = vadd.f32 %v525, %v589
        %591 = vmatmul.bf16.gmra.mxu0 %v566
        %v592 = vpop.f32.mrf.mxu0
        %v593 = vadd.f32 %v529, %v592
        %v594 = vpop.f32.mrf.mxu0
        %v595 = vadd.f32 %v533, %v594
        %596 = vdwg.mxu0
        %597 = vmatpush.bf16.msra.mxu0 0
        %598 = vmatpush.bf16.msra.mxu0 0
        %599 = vmatpush.bf16.msra.mxu0 0
        %600 = vmatpush.bf16.msra.mxu0 0
        %601 = vmatpush.bf16.msra.mxu0 %v502
        %602 = vmatpush.bf16.msra.mxu0 %v500
        %603 = vmatpush.bf16.msra.mxu0 %v498
        %604 = vmatpush.bf16.msra.mxu0 %v496
        %605 = vmatmul.bf16.gmra.mxu0 %v557
        %v606 = vpop.f32.mrf.mxu0
        %v607 = vadd.f32 %v505, %v606
        %v608 = vpop.f32.mrf.mxu0
        %v609 = vadd.f32 %v509, %v608
        %610 = vmatmul.bf16.gmra.mxu0 %v560
        %v611 = vpop.f32.mrf.mxu0
        %v612 = vadd.f32 %v513, %v611
        %v613 = vpop.f32.mrf.mxu0
        %v614 = vadd.f32 %v517, %v613
        %615 = vmatmul.bf16.gmra.mxu0 %v563
        %v616 = vpop.f32.mrf.mxu0
        %v617 = vadd.f32 %v521, %v616
        %v618 = vpop.f32.mrf.mxu0
        %v619 = vadd.f32 %v525, %v618
        %620 = vmatmul.bf16.gmra.mxu0 %v566
        %v621 = vpop.f32.mrf.mxu0
        %v622 = vadd.f32 %v529, %v621
        %v623 = vpop.f32.mrf.mxu0
        %v624 = vadd.f32 %v533, %v623
        %625 = vdwg.mxu0
        %v626 = vmax.f32 %v578, 0.0
        %v627 = vmax.f32 %v607, 0.0
        %v628 = vmax.f32 %v580, 0.0
        %v629 = vmax.f32 %v609, 0.0
        %v630 = vmax.f32 %v583, 0.0
        %v631 = vmax.f32 %v612, 0.0
        %v632 = vmax.f32 %v585, 0.0
        %v633 = vmax.f32 %v614, 0.0
        %v634 = vmax.f32 %v588, 0.0
        %v635 = vmax.f32 %v617, 0.0
        %v636 = vmax.f32 %v590, 0.0
        %v637 = vmax.f32 %v619, 0.0
        %v638 = vmax.f32 %v593, 0.0
        %v639 = vmax.f32 %v622, 0.0
        %v640 = vmax.f32 %v595, 0.0
        %v641 = vmax.f32 %v624, 0.0
        %642 = vset.pattern.permute.xlu0 2
        %643 = vperm.xlu0 %642, %v276
        %v644 = vpop.permute.xlu0 %643
        %646 = vset.pattern.permute.xlu0 2
        %647 = vperm.xlu0 %646, %v277
        %v648 = vpop.permute.xlu0 %647
        %650 = vset.pattern.permute.xlu0 2
        %651 = vperm.xlu0 %650, %v278
        %v652 = vpop.permute.xlu0 %651
        %654 = vset.pattern.permute.xlu0 2
        %655 = vperm.xlu0 %654, %v279
        %v656 = vpop.permute.xlu0 %655
        %658 = vset.pattern.permute.xlu0 2
        %659 = vperm.xlu0 %658, %v280
        %v660 = vpop.permute.xlu0 %659
        %662 = vset.pattern.permute.xlu0 2
        %663 = vperm.xlu0 %662, %v281
        %v664 = vpop.permute.xlu0 %663
        %666 = vset.pattern.permute.xlu0 2
        %667 = vperm.xlu0 %666, %v282
        %v668 = vpop.permute.xlu0 %667
        %670 = vset.pattern.permute.xlu0 2
        %671 = vperm.xlu0 %670, %v283
        %v672 = vpop.permute.xlu0 %671
        %v674 = vmul.f32 %v626, %v644
        %v675 = vmul.f32 %v627, %v644
        %v676 = vmul.f32 %v628, %v648
        %v677 = vmul.f32 %v629, %v648
        %v678 = vmul.f32 %v630, %v652
        %v679 = vmul.f32 %v631, %v652
        %v680 = vmul.f32 %v632, %v656
        %v681 = vmul.f32 %v633, %v656
        %v682 = vmul.f32 %v634, %v660
        %v683 = vmul.f32 %v635, %v660
        %v684 = vmul.f32 %v636, %v664
        %v685 = vmul.f32 %v637, %v664
        %v686 = vmul.f32 %v638, %v668
        %v687 = vmul.f32 %v639, %v668
        %v688 = vmul.f32 %v640, %v672
        %v689 = vmul.f32 %v641, %v672
        %v690 = vadd.f32 %v674, %v676
        %v691 = vadd.f32 %v690, %v678
        %v692 = vadd.f32 %v691, %v680
        %v693 = vadd.f32 %v692, %v682
        %v694 = vadd.f32 %v693, %v684
        %v695 = vadd.f32 %v694, %v686
        %v696 = vadd.f32 %v695, %v688
        %v697 = vrot.slane %v696, 4
        %v698 = vadd.f32 %v696, %v697
        %v699 = vrot.slane %v698, 2
        %v700 = vadd.f32 %v698, %v699
        %v701 = vrot.slane %v700, 1
        %v702 = vadd.f32 %v700, %v701
        %v703 = vadd.f32 %v675, %v677
        %v704 = vadd.f32 %v703, %v679
        %v705 = vadd.f32 %v704, %v681
        %v706 = vadd.f32 %v705, %v683
        %v707 = vadd.f32 %v706, %v685
        %v708 = vadd.f32 %v707, %v687
        %v709 = vadd.f32 %v708, %v689
        %v710 = vrot.slane %v709, 4
        %v711 = vadd.f32 %v709, %v710
        %v712 = vrot.slane %v711, 2
        %v713 = vadd.f32 %v711, %v712
        %v714 = vrot.slane %v713, 1
        %v715 = vadd.f32 %v713, %v714
        %s716 = sld [smem:[#allocation2]]
        %v717 = vstv %s716
        %v718 = vadd.f32 %v702, %v717
        %v719 = vadd.f32 %v715, %v717
        %v722 = vrot.slane %v719, 7
        %vm723 = vcmask 1040384
        %v724 = vsel %vm723, %v718, %v722
        %v726 = vlaneseq
        %vm727 = vcmp.ge.s32.totalorder %v726, 0
        %vm728 = vcmp.lt.s32.totalorder %v726, 256
        %vm729 = vmand %vm727, %vm728
        %730 = vst.msk [vmem:[%s219] sm:$0x3] %vm729, %v724
        %s731 = sand.u32 %s138, 1
        %s732 = scalar_lea.sflag [#allocation4], %s731
        %s733 = sand.u32 %s138, 1
        %s734 = smul.addr %s733, 2
        %s735 = scalar_lea.vmem [#allocation3], %s734
        // Predicated region
        $region41: #{tpu_custom_call.1} parent=39 // pred_check
          %p736 = pneg %p148
        $region42: #{tpu_custom_call.1} parent=39 // pred_check_branch
          %738 = sbr.rel (%p736) target = $region44
        $region43: #{tpu_custom_call.1} parent=39 // pred_region
          %s739 = smul.u32 2, %s20
          %741 = vsyncadd %s732, 0
          %s742 = scalar_lea.hbm %s5, %s739
          %s744 = sshll.u32 %s735, 4
          %s745 = int_to_ptr.vmem [resolvable:$true] %s744
          %s746 = sshll.u32 %s742, 4
          %s747 = int_to_ptr.hbm [resolvable:$true] %s746
          %749 = dma.vmem_to_hbm [thread:$0]  %s745, 32, %s747, %s732
        $region44: #{tpu_custom_call.1} parent=39 // pred_fallthru
          _
      $region40: #{tpu_custom_call.1} parent=5 // pred_fallthru
        _
      %p750 = scmp.le.s32.totalorder 2, %s15
      // Predicated region
      $region45: #{tpu_custom_call.1} parent=5 // pred_check
        %p751 = pneg %p750
      $region46: #{tpu_custom_call.1} parent=5 // pred_check_branch
        %753 = sbr.rel (%p751) target = $region48
      $region47: #{tpu_custom_call.1} parent=5 // pred_region
        %s754 = ssub.s32 %s15, 2
        // Predicated region
        $region49: #{tpu_custom_call.1} parent=47 // pred_check
          %p755 = pneg %p154
        $region50: #{tpu_custom_call.1} parent=47 // pred_check_branch
          %757 = sbr.rel (%p755) target = $region52
        $region51: #{tpu_custom_call.1} parent=47 // pred_region
          %s758 = sand.u32 %s139, 1
          %s759 = scalar_lea.sflag [#allocation4], %s758
          %s760 = sand.u32 %s139, 1
          %s761 = smul.addr %s760, 2
          %s762 = scalar_lea.vmem [#allocation3], %s761
          %764 = dma.done %s759, 32
        $region52: #{tpu_custom_call.1} parent=47 // pred_fallthru
          _
      $region48: #{tpu_custom_call.1} parent=5 // pred_fallthru
        _
    $region6: #{tpu_custom_call.1} parent=1 // loop_footer
      %s19 = sadd.s32 1, %s15
    $region7: #{tpu_custom_call.1} parent=1 // loop_footer_branch
      %14 = sbr.rel target = $region3
    $region8: #{tpu_custom_call.1} parent=1 // loop_exit
      _
    %765 = vsyncpa [#allocation4], 1
    %s766 = scalar_lea.sflag [#allocation4], 1
    %767 = vsyncpa %s766, 1

</llo_original>
